<compile_context>
chip_gen: v7x
topology: tpu7x:2x2x1
jax: 0.10.0
libtpu: 0.0.40
codegen_flags: <defaults>
</compile_context>

<pallas_src>
import functools

import jax
import jax.numpy as jnp
from jax.experimental import pallas as pl
from jax.experimental.pallas import tpu as pltpu

_MXU_DTYPE = jnp.bfloat16  # matmul input dtype; accumulation stays f32
_NEG_SLOPE = 0.2


def _round_up(x, m):
    return ((x + m - 1) // m) * m


def _preferred_batch_tile():
    """Fixed M-tile matched to the MXU of the attached TPU generation."""
    try:
        kind = jax.devices()[0].device_kind.lower()
    except Exception:  # pragma: no cover - interpret / CPU fallback
        return 256
    # v2-v5: 128x128 MXU tiles -> M=128 fills the array.  v6e/v7x: 2x256x256.
    if any(tag in kind for tag in ("v2", "v3", "v4", "v5")):
        return 128
    return 256


def _pick_batch_tile(batch):
    """Fixed, sublane-aligned batch tile; >= 2 grid steps for large batches."""
    preferred = _preferred_batch_tile()
    tb = min(preferred, _round_up(batch, 8))
    # For large batches make sure the "parallel" axis has >= 2 grid steps so
    # v7x's two TensorCores both get work (no effect on v5e/v6e correctness).
    if batch >= 512 and _round_up(batch, tb) // tb < 2:
        tb = _round_up(pl.cdiv(batch, 2), 8)
    return tb


def _make_mapping_kernel(num_layers, normalize_input, eps,
                         negative_slope=_NEG_SLOPE, mxu_dtype=_MXU_DTYPE):
    """Builds the fused MappingNetwork kernel for a static layer count."""

    def kernel(*refs):
        # refs = (z, W0, b0, ..., W_{L-1}, b_{L-1}, w_out[, z_out])
        z_ref = refs[0]
        layer_refs = refs[1:1 + 2 * num_layers]
        out_refs = refs[1 + 2 * num_layers:]
        if normalize_input:
            w_out_ref, z_out_ref = out_refs
        else:
            (w_out_ref,) = out_refs

        # Compute in f32 regardless of storage dtype.
        x = z_ref[...].astype(jnp.float32)

        if normalize_input:
            # PixelNormLayer(dim=1): x * rsqrt(mean(x^2, dim=1) + eps)
            scale = jax.lax.rsqrt(
                jnp.mean(jnp.square(x), axis=-1, keepdims=True) + eps)
            x = x * scale
            # results['z'] in the PyTorch module is the normalized z.
            z_out_ref[...] = x.astype(z_out_ref.dtype)

        for i in range(num_layers):
            w = layer_refs[2 * i][...]        # (in_i, out_i), bf16 (pre-cast)
            b = layer_refs[2 * i + 1][...]    # (1, out_i), f32
            # bf16 x bf16 -> f32 accumulate on the MXU.
            x = jnp.dot(x.astype(mxu_dtype), w,
                        preferred_element_type=jnp.float32) + b
            # nn.LeakyReLU(0.2): slope < 1  =>  max(x, 0.2*x).
            x = jnp.maximum(x, negative_slope * x)

        w_out_ref[...] = x.astype(w_out_ref.dtype)

    return kernel


def prepare_mapping_params(weights, biases, mxu_dtype=_MXU_DTYPE):
    """One-time packing of nn.Linear params (hoisted out of the forward path).

    weights[i]: (out_i, in_i)  -- PyTorch nn.Linear layout
    biases[i] : (out_i,)
    Returns a tuple of (W^T as bf16 (in, out), bias as f32 (1, out)) pairs.
    """
    params = []
    for w, b in zip(weights, biases):
        params.append((jnp.asarray(w).T.astype(mxu_dtype),
                       jnp.asarray(b, jnp.float32).reshape(1, -1)))
    return tuple(params)


@functools.partial(
    jax.jit,
    static_argnames=("normalize_input", "eps", "num_outputs",
                     "repeat_output", "output_dim"))
def mapping_network_forward(z, params, *, normalize_input, eps, num_outputs,
                            repeat_output, output_dim, label=None):
    """Pallas equivalent of MappingNetwork.forward for the label_dim == 0 path."""
    if label is not None:
        # TODO(synk): label_dim > 0 path (EqualLinear embedding + concat / gating) not implemented.
        raise NotImplementedError("label embedding path not implemented")
    if z.ndim != 2:
        raise ValueError(f"latent code must be [batch, input_dim]; got {z.shape}")

    B, in_dim = z.shape
    num_layers = len(params)
    out_dim_eff = params[-1][0].shape[1]
    max_dim = max([in_dim] + [p[0].shape[1] for p in params])

    # --- grid / tiling: fixed MXU-sized batch tile, pad ragged batches ------
    tb = _pick_batch_tile(B)
    Bp = _round_up(B, tb)
    z_in = jnp.pad(z, ((0, Bp - B), (0, 0))) if Bp != B else z
    grid = (Bp // tb,)

    # --- VMEM budget (matters only when dims scale; cap against v7x 64 MiB) -
    const_bytes = sum(int(w.size) * w.dtype.itemsize +
                      int(b.size) * b.dtype.itemsize for w, b in params)
    io_bytes = 4 * tb * max(in_dim, out_dim_eff) * z.dtype.itemsize
    act_bytes = 2 * tb * max_dim * 4
    est = const_bytes + io_bytes + act_bytes
    vmem_limit = min(int(est * 1.5), 60 << 20) if est > (30 << 20) else None

    # --- specs ---------------------------------------------------------------
    in_specs = [pl.BlockSpec((tb, in_dim), lambda i: (i, 0))]
    operands = [z_in]
    # Constant blocks never change across grid steps: single-buffer them when
    # they are big enough for the extra VMEM copy to matter.
    const_mode = pl.Buffered(1) if max_dim >= 1024 else None
    for w, b in params:
        in_specs.append(
            pl.BlockSpec(w.shape, lambda i: (0, 0), pipeline_mode=const_mode))
        in_specs.append(
            pl.BlockSpec(b.shape, lambda i: (0, 0), pipeline_mode=const_mode))
        operands.extend([w, b])

    out_shapes = [jax.ShapeDtypeStruct((Bp, out_dim_eff), z.dtype)]
    out_specs = [pl.BlockSpec((tb, out_dim_eff), lambda i: (i, 0))]
    if normalize_input:
        # Only emit the normalized-z output when it is actually produced.
        out_shapes.append(jax.ShapeDtypeStruct((Bp, in_dim), z.dtype))
        out_specs.append(pl.BlockSpec((tb, in_dim), lambda i: (i, 0)))

    kernel = _make_mapping_kernel(num_layers, normalize_input, float(eps))

    outs = pl.pallas_call(
        kernel,
        out_shape=tuple(out_shapes),
        grid=grid,
        in_specs=in_specs,
        out_specs=tuple(out_specs),
        compiler_params=pltpu.CompilerParams(
            dimension_semantics=("parallel",),
            vmem_limit_bytes=vmem_limit),
    )(*operands)

    if normalize_input:
        w_pad, z_pad = outs
        z_result = z_pad[:B] if Bp != B else z_pad
    else:
        (w_pad,) = outs
        z_result = z
    w_out = w_pad[:B] if Bp != B else w_pad

    wp = None
    if num_outputs is not None:
        if repeat_output:
            wp = jnp.broadcast_to(
                w_out[:, None, :], (B, num_outputs, out_dim_eff))
        else:
            assert out_dim_eff == num_outputs * output_dim, (
                "last layer width must equal num_outputs * output_dim when "
                "repeat_output=False")
            wp = w_out.reshape(B, num_outputs, output_dim)

    return {"z": z_result, "label": label, "w": w_out, "wp": wp}


if __name__ == "__main__":
    # Small, lane-aligned configuration consistent with the module.
    B = 8
    input_dim, hidden_dim, output_dim = 128, 256, 128
    num_layers = 3
    num_outputs = 4
    repeat_output = True
    normalize_input = True
    eps = 1e-8

    key = jax.random.PRNGKey(0)
    keys = jax.random.split(key, 2 * num_layers + 1)
    z = jax.random.normal(keys[0], (B, input_dim), dtype=jnp.float32)

    dims = [input_dim] + [hidden_dim] * (num_layers - 1) + [output_dim]
    weights, biases = [], []
    for i in range(num_layers):
        fan_in, fan_out = dims[i], dims[i + 1]
        # PyTorch nn.Linear layout (out, in); kaiming-ish scale for the demo.
        w = jax.random.normal(keys[1 + 2 * i], (fan_out, fan_in),
                              jnp.float32) / jnp.sqrt(float(fan_in))
        b = 0.01 * jax.random.normal(keys[2 + 2 * i], (fan_out,), jnp.float32)
        weights.append(w)
        biases.append(b)

    # One-time param packing (transposes / casts hoisted out of forward).
    params = prepare_mapping_params(weights, biases)

    results = mapping_network_forward(
        z, params,
        normalize_input=normalize_input, eps=eps,
        num_outputs=num_outputs, repeat_output=repeat_output,
        output_dim=output_dim)
    jax.block_until_ready(results["w"])
    jax.block_until_ready(results["wp"])

    # Pure-JAX references mirroring the PyTorch forward.
    x = z
    if normalize_input:
        x = x * jax.lax.rsqrt(
            jnp.mean(jnp.square(x), axis=1, keepdims=True) + eps)
    z_ref = x

    def ref_forward(x0, emulate_bf16):
        x_ = x0
        for w, b in zip(weights, biases):
            if emulate_bf16:
                y = jnp.dot(x_.astype(jnp.bfloat16),
                            w.T.astype(jnp.bfloat16),
                            preferred_element_type=jnp.float32) + b
            else:
                y = x_ @ w.T + b
            x_ = jnp.maximum(y, 0.2 * y)
        return x_

    w_ref_bf16 = ref_forward(z_ref, True)    # same bf16-in / f32-acc path
    w_ref_f32 = ref_forward(z_ref, False)    # exact PyTorch-equivalent math

    assert results["w"].shape == (B, output_dim)
    assert results["wp"].shape == (B, num_outputs, output_dim)
    assert jnp.allclose(results["z"], z_ref, rtol=1e-5, atol=1e-5)
    assert jnp.allclose(results["w"], w_ref_bf16, rtol=1e-3, atol=1e-3)
    assert jnp.allclose(results["w"], w_ref_f32, rtol=5e-2, atol=5e-2)
    assert jnp.allclose(
        results["wp"],
        jnp.broadcast_to(w_ref_bf16[:, None, :], (B, num_outputs, output_dim)),
        rtol=1e-3, atol=1e-3)

    print("KERNEL_OK")
</pallas_src>

<mosaic_0001>
module attributes {stable_mosaic.version = 11 : i64} {
  func.func @kernel(%arg0: i32, %arg1: memref<8x128xf32, #tpu.memory_space<vmem>>, %arg2: memref<128x256xbf16, #tpu.memory_space<vmem>>, %arg3: memref<1x256xf32, #tpu.memory_space<vmem>>, %arg4: memref<256x256xbf16, #tpu.memory_space<vmem>>, %arg5: memref<1x256xf32, #tpu.memory_space<vmem>>, %arg6: memref<256x128xbf16, #tpu.memory_space<vmem>>, %arg7: memref<1x128xf32, #tpu.memory_space<vmem>>, %arg8: memref<8x128xf32, #tpu.memory_space<vmem>>, %arg9: memref<8x128xf32, #tpu.memory_space<vmem>>) attributes {dimension_semantics = [#tpu.dimension_semantics<parallel>], iteration_bounds = array<i64: 1>, scalar_prefetch = 0 : i64, scratch_operands = 0 : i64, tpu.core_type = #tpu.core_type<tc>, window_params = [{transform_indices = @transform_0, window_bounds = array<i64: 8, 128>}, {pipeline_mode = #tpu.pipeline_mode<synchronous>, transform_indices = @transform_1, window_bounds = array<i64: 128, 256>}, {pipeline_mode = #tpu.pipeline_mode<synchronous>, transform_indices = @transform_2, window_bounds = array<i64: 1, 256>}, {pipeline_mode = #tpu.pipeline_mode<synchronous>, transform_indices = @transform_3, window_bounds = array<i64: 256, 256>}, {pipeline_mode = #tpu.pipeline_mode<synchronous>, transform_indices = @transform_4, window_bounds = array<i64: 1, 256>}, {pipeline_mode = #tpu.pipeline_mode<synchronous>, transform_indices = @transform_5, window_bounds = array<i64: 256, 128>}, {pipeline_mode = #tpu.pipeline_mode<synchronous>, transform_indices = @transform_6, window_bounds = array<i64: 1, 128>}, {transform_indices = @transform_7, window_bounds = array<i64: 8, 128>}, {transform_indices = @transform_8, window_bounds = array<i64: 8, 128>}]} {
    %c0 = arith.constant 0 : index
    %c0_0 = arith.constant 0 : index
    %0 = vector.load %arg1[%c0, %c0_0] : memref<8x128xf32, #tpu.memory_space<vmem>>, vector<8x128xf32>
    %1 = arith.mulf %0, %0 : vector<8x128xf32>
    %cst = arith.constant dense<0.000000e+00> : vector<8xf32>
    %2 = vector.multi_reduction <add>, %1, %cst [1] : vector<8x128xf32> to vector<8xf32>
    %3 = vector.shape_cast %2 : vector<8xf32> to vector<8x1xf32>
    %cst_1 = arith.constant 1.280000e+02 : f32
    %4 = vector.broadcast %cst_1 : f32 to vector<8x1xf32>
    %5 = arith.divf %3, %4 : vector<8x1xf32>
    %cst_2 = arith.constant 9.99999993E-9 : f32
    %6 = vector.broadcast %cst_2 : f32 to vector<8x1xf32>
    %7 = arith.addf %5, %6 : vector<8x1xf32>
    %8 = math.rsqrt %7 : vector<8x1xf32>
    %9 = vector.broadcast %8 : vector<8x1xf32> to vector<8x128xf32>
    %10 = arith.mulf %0, %9 : vector<8x128xf32>
    %c0_3 = arith.constant 0 : index
    %c0_4 = arith.constant 0 : index
    %11 = vector.load %arg9[%c0_3, %c0_4] : memref<8x128xf32, #tpu.memory_space<vmem>>, vector<8x128xf32>
    tpu.vector_store %arg9[%c0_3, %c0_4], %10 {strides = array<i32>} : memref<8x128xf32, #tpu.memory_space<vmem>>, vector<8x128xf32>,
    %c0_5 = arith.constant 0 : index
    %c0_6 = arith.constant 0 : index
    %12 = vector.load %arg2[%c0_5, %c0_6] : memref<128x256xbf16, #tpu.memory_space<vmem>>, vector<128x256xbf16>
    %c0_7 = arith.constant 0 : index
    %c0_8 = arith.constant 0 : index
    %13 = vector.load %arg3[%c0_7, %c0_8] : memref<1x256xf32, #tpu.memory_space<vmem>>, vector<1x256xf32>
    %14 = arith.truncf %10 : vector<8x128xf32> to vector<8x128xbf16>
    %cst_9 = arith.constant dense<0.000000e+00> : vector<8x256xf32>
    %15 = tpu.matmul %14, %12, %cst_9 {dimension_numbers = #tpu.dot_dimension_numbers<[1], [0], [0], [1], [0, 0, 1, 1], [], []>} : vector<8x128xbf16>, vector<128x256xbf16>, vector<8x256xf32> -> vector<8x256xf32>
    %16 = vector.broadcast %13 : vector<1x256xf32> to vector<8x256xf32>
    %17 = arith.addf %15, %16 : vector<8x256xf32>
    %cst_10 = arith.constant 2.000000e-01 : f32
    %18 = vector.broadcast %cst_10 : f32 to vector<8x256xf32>
    %19 = arith.mulf %18, %17 : vector<8x256xf32>
    %20 = arith.maximumf %17, %19 : vector<8x256xf32>
    %c0_11 = arith.constant 0 : index
    %c0_12 = arith.constant 0 : index
    %21 = vector.load %arg4[%c0_11, %c0_12] : memref<256x256xbf16, #tpu.memory_space<vmem>>, vector<256x256xbf16>
    %c0_13 = arith.constant 0 : index
    %c0_14 = arith.constant 0 : index
    %22 = vector.load %arg5[%c0_13, %c0_14] : memref<1x256xf32, #tpu.memory_space<vmem>>, vector<1x256xf32>
    %23 = arith.truncf %20 : vector<8x256xf32> to vector<8x256xbf16>
    %cst_15 = arith.constant dense<0.000000e+00> : vector<8x256xf32>
    %24 = tpu.matmul %23, %21, %cst_15 {dimension_numbers = #tpu.dot_dimension_numbers<[1], [0], [0], [1], [0, 0, 1, 1], [], []>} : vector<8x256xbf16>, vector<256x256xbf16>, vector<8x256xf32> -> vector<8x256xf32>
    %25 = vector.broadcast %22 : vector<1x256xf32> to vector<8x256xf32>
    %26 = arith.addf %24, %25 : vector<8x256xf32>
    %cst_16 = arith.constant 2.000000e-01 : f32
    %27 = vector.broadcast %cst_16 : f32 to vector<8x256xf32>
    %28 = arith.mulf %27, %26 : vector<8x256xf32>
    %29 = arith.maximumf %26, %28 : vector<8x256xf32>
    %c0_17 = arith.constant 0 : index
    %c0_18 = arith.constant 0 : index
    %30 = vector.load %arg6[%c0_17, %c0_18] : memref<256x128xbf16, #tpu.memory_space<vmem>>, vector<256x128xbf16>
    %c0_19 = arith.constant 0 : index
    %c0_20 = arith.constant 0 : index
    %31 = vector.load %arg7[%c0_19, %c0_20] : memref<1x128xf32, #tpu.memory_space<vmem>>, vector<1x128xf32>
    %32 = arith.truncf %29 : vector<8x256xf32> to vector<8x256xbf16>
    %cst_21 = arith.constant dense<0.000000e+00> : vector<8x128xf32>
    %33 = tpu.matmul %32, %30, %cst_21 {dimension_numbers = #tpu.dot_dimension_numbers<[1], [0], [0], [1], [0, 0, 1, 1], [], []>} : vector<8x256xbf16>, vector<256x128xbf16>, vector<8x128xf32> -> vector<8x128xf32>
    %34 = vector.broadcast %31 : vector<1x128xf32> to vector<8x128xf32>
    %35 = arith.addf %33, %34 : vector<8x128xf32>
    %cst_22 = arith.constant 2.000000e-01 : f32
    %36 = vector.broadcast %cst_22 : f32 to vector<8x128xf32>
    %37 = arith.mulf %36, %35 : vector<8x128xf32>
    %38 = arith.maximumf %35, %37 : vector<8x128xf32>
    %c0_23 = arith.constant 0 : index
    %c0_24 = arith.constant 0 : index
    %39 = vector.load %arg8[%c0_23, %c0_24] : memref<8x128xf32, #tpu.memory_space<vmem>>, vector<8x128xf32>
    tpu.vector_store %arg8[%c0_23, %c0_24], %38 {strides = array<i32>} : memref<8x128xf32, #tpu.memory_space<vmem>>, vector<8x128xf32>,
    return
  }
  func.func @transform_0(%arg0: i32) -> (i32, i32) {
    %c0_i32 = arith.constant 0 : i32
    %c0_i32_0 = arith.constant 0 : i32
    return %arg0, %c0_i32 : i32, i32
  }
  func.func @transform_1(%arg0: i32) -> (i32, i32) {
    %c0_i32 = arith.constant 0 : i32
    %c0_i32_0 = arith.constant 0 : i32
    %c0_i32_1 = arith.constant 0 : i32
    return %c0_i32, %c0_i32_0 : i32, i32
  }
  func.func @transform_2(%arg0: i32) -> (i32, i32) {
    %c0_i32 = arith.constant 0 : i32
    %c0_i32_0 = arith.constant 0 : i32
    %c0_i32_1 = arith.constant 0 : i32
    return %c0_i32, %c0_i32_0 : i32, i32
  }
  func.func @transform_3(%arg0: i32) -> (i32, i32) {
    %c0_i32 = arith.constant 0 : i32
    %c0_i32_0 = arith.constant 0 : i32
    %c0_i32_1 = arith.constant 0 : i32
    return %c0_i32, %c0_i32_0 : i32, i32
  }
  func.func @transform_4(%arg0: i32) -> (i32, i32) {
    %c0_i32 = arith.constant 0 : i32
    %c0_i32_0 = arith.constant 0 : i32
    %c0_i32_1 = arith.constant 0 : i32
    return %c0_i32, %c0_i32_0 : i32, i32
  }
  func.func @transform_5(%arg0: i32) -> (i32, i32) {
    %c0_i32 = arith.constant 0 : i32
    %c0_i32_0 = arith.constant 0 : i32
    %c0_i32_1 = arith.constant 0 : i32
    return %c0_i32, %c0_i32_0 : i32, i32
  }
  func.func @transform_6(%arg0: i32) -> (i32, i32) {
    %c0_i32 = arith.constant 0 : i32
    %c0_i32_0 = arith.constant 0 : i32
    %c0_i32_1 = arith.constant 0 : i32
    return %c0_i32, %c0_i32_0 : i32, i32
  }
  func.func @transform_7(%arg0: i32) -> (i32, i32) {
    %c0_i32 = arith.constant 0 : i32
    %c0_i32_0 = arith.constant 0 : i32
    return %arg0, %c0_i32 : i32, i32
  }
  func.func @transform_8(%arg0: i32) -> (i32, i32) {
    %c0_i32 = arith.constant 0 : i32
    %c0_i32_0 = arith.constant 0 : i32
    return %arg0, %c0_i32 : i32, i32
  }
}

</mosaic_0001>

<llo_original>
// kernel: mapping_network_forward.1
$region0: #{mapping_network_forward.1}
  #allocation0 [shape = 'u32[]', space=smem, size = 0x4, offset = 0x4, fixed_abs, tag = 'smem constant byte address 0x4 - core index']
  #allocation1 [shape = 'u32[144,128]{1,0:T(1,128)}', space=vmem, size = 0x12000, scoped, tag = 'internal scratch']
  %s0 = inlined_call_operand.hbm [shape: f32[8,128], index: 0, kind: input, shape index: {}]
  %s1 = inlined_call_operand.hbm [shape: bf16[128,256], index: 1, kind: input, shape index: {}]
  %s2 = inlined_call_operand.vmem [shape: f32[1,256], index: 2, kind: input, shape index: {}]
  %s3 = inlined_call_operand.hbm [shape: bf16[256,256], index: 3, kind: input, shape index: {}]
  %s4 = inlined_call_operand.vmem [shape: f32[1,256], index: 4, kind: input, shape index: {}]
  %s5 = inlined_call_operand.hbm [shape: bf16[256,128], index: 5, kind: input, shape index: {}]
  %s6 = inlined_call_operand.vmem [shape: f32[1,128], index: 6, kind: input, shape index: {}]
  %s7 = inlined_call_operand.vmem [shape: f32[8,128], index: 7, kind: output, shape index: {0}]
  %s8 = inlined_call_operand.hbm [shape: f32[8,128], index: 8, kind: output, shape index: {1}]
  %9 = xla_tuple %s7, %s8
  %s10 = sld [smem:[#allocation0]]
  $region62: #{mapping_network_forward.1} parent=0
    _
  %s12 = ssub.s32 1, %s10
  %s13 = scalar_select 0, %s12, %s10
  $region1: #{mapping_network_forward.1} parent=0
    #allocation2 [shape = 'u8[4096]{0}', space=vmem, size = 0x1000, scoped, tag = 'input window, operand 0, single buffered']
    #allocation3 [shape = 's32[1]{0}', space=sflag, size = 0x4, scoped, tag = 'scoped memory for mapping_network_forward.1']
    #allocation4 [shape = 's32[1]{0}', space=sflag, size = 0x4, scoped, tag = 'scoped memory for mapping_network_forward.1']
    #allocation5 [shape = 'u8[65536]{0}', space=vmem, size = 0x10000, scoped, tag = 'input window, operand 1, single buffered']
    #allocation6 [shape = 's32[1]{0}', space=sflag, size = 0x4, scoped, tag = 'scoped memory for mapping_network_forward.1']
    #allocation7 [shape = 'u8[131072]{0}', space=vmem, size = 0x20000, scoped, tag = 'input window, operand 3, single buffered']
    #allocation8 [shape = 'u8[65536]{0}', space=vmem, size = 0x10000, scoped, tag = 'input window, operand 5, single buffered']
    #allocation9 [shape = 's32[1]{0}', space=sflag, size = 0x4, scoped, tag = 'scoped memory for mapping_network_forward.1']
    #allocation10 [shape = 'u8[4096]{0}', space=vmem, size = 0x1000, scoped, tag = 'output window, operand 1, single buffered']
    %14 = vsyncpa [#allocation3], 0
    %15 = vsyncpa [#allocation6], 0
    %16 = vsyncpa [#allocation9], 0
    %17 = vsyncpa [#allocation4], 0
    // Predicated region
    $region2: #{mapping_network_forward.1} parent=1 // pred_check
      _
    $region3: #{mapping_network_forward.1} parent=1 // pred_check_branch
      %19 = sbr.rel (0) target = $region5
    $region4: #{mapping_network_forward.1} parent=1 // pred_region
      %s21 = ssub.s32 128, 128
      %22 = vsyncadd [#allocation3], %s21
      %s24 = sshll.u32 [#allocation2], 4
      %s25 = int_to_ptr.vmem [resolvable:$true] %s24
      %27 = dma.hbm_to_vmem [thread:$0]  %s0, 128, %s25, [#allocation3]
    $region5: #{mapping_network_forward.1} parent=1 // pred_fallthru
      _
    // Predicated region
    $region6: #{mapping_network_forward.1} parent=1 // pred_check
      _
    $region7: #{mapping_network_forward.1} parent=1 // pred_check_branch
      %29 = sbr.rel (0) target = $region9
    $region8: #{mapping_network_forward.1} parent=1 // pred_region
      %s31 = ssub.s32 2048, 2048
      %32 = vsyncadd [#allocation6], %s31
      %s33 = sshll.u32 [#allocation5], 4
      %s34 = int_to_ptr.vmem [resolvable:$true] %s33
      %39 = dma.hbm_to_vmem [thread:$0]  %s1, 2048, %s34, [#allocation6], 128, 128, 8
    $region9: #{mapping_network_forward.1} parent=1 // pred_fallthru
      _
    // Predicated region
    $region10: #{mapping_network_forward.1} parent=1 // pred_check
      _
    $region11: #{mapping_network_forward.1} parent=1 // pred_check_branch
      %41 = sbr.rel (0) target = $region13
    $region12: #{mapping_network_forward.1} parent=1 // pred_region
      _
    $region13: #{mapping_network_forward.1} parent=1 // pred_fallthru
      _
    // Predicated region
    $region14: #{mapping_network_forward.1} parent=1 // pred_check
      _
    $region15: #{mapping_network_forward.1} parent=1 // pred_check_branch
      %43 = sbr.rel (0) target = $region17
    $region16: #{mapping_network_forward.1} parent=1 // pred_region
      %s45 = ssub.s32 4096, 4096
      %46 = vsyncadd [#allocation6], %s45
      %s47 = sshll.u32 [#allocation7], 4
      %s48 = int_to_ptr.vmem [resolvable:$true] %s47
      %53 = dma.hbm_to_vmem [thread:$0]  %s3, 4096, %s48, [#allocation6], 128, 128, 8
    $region17: #{mapping_network_forward.1} parent=1 // pred_fallthru
      _
    // Predicated region
    $region18: #{mapping_network_forward.1} parent=1 // pred_check
      _
    $region19: #{mapping_network_forward.1} parent=1 // pred_check_branch
      %55 = sbr.rel (0) target = $region21
    $region20: #{mapping_network_forward.1} parent=1 // pred_region
      _
    $region21: #{mapping_network_forward.1} parent=1 // pred_fallthru
      _
    // Predicated region
    $region22: #{mapping_network_forward.1} parent=1 // pred_check
      _
    $region23: #{mapping_network_forward.1} parent=1 // pred_check_branch
      %57 = sbr.rel (0) target = $region25
    $region24: #{mapping_network_forward.1} parent=1 // pred_region
      %s59 = ssub.s32 2048, 2048
      %60 = vsyncadd [#allocation9], %s59
      %s61 = sshll.u32 [#allocation8], 4
      %s62 = int_to_ptr.vmem [resolvable:$true] %s61
      %67 = dma.hbm_to_vmem [thread:$0]  %s5, 2048, %s62, [#allocation9], 64, 64, 4
    $region25: #{mapping_network_forward.1} parent=1 // pred_fallthru
      _
    // Predicated region
    $region26: #{mapping_network_forward.1} parent=1 // pred_check
      _
    $region27: #{mapping_network_forward.1} parent=1 // pred_check_branch
      %69 = sbr.rel (0) target = $region29
    $region28: #{mapping_network_forward.1} parent=1 // pred_region
      _
    $region29: #{mapping_network_forward.1} parent=1 // pred_fallthru
      _
    // Predicated region
    $region30: #{mapping_network_forward.1} parent=1 // pred_check
      _
    $region31: #{mapping_network_forward.1} parent=1 // pred_check_branch
      %71 = sbr.rel (0) target = $region33
    $region32: #{mapping_network_forward.1} parent=1 // pred_region
      %72 = dma.done [#allocation3], 128
    $region33: #{mapping_network_forward.1} parent=1 // pred_fallthru
      _
    // Predicated region
    $region34: #{mapping_network_forward.1} parent=1 // pred_check
      _
    $region35: #{mapping_network_forward.1} parent=1 // pred_check_branch
      %74 = sbr.rel (0) target = $region37
    $region36: #{mapping_network_forward.1} parent=1 // pred_region
      %75 = dma.done [#allocation6], 2048
    $region37: #{mapping_network_forward.1} parent=1 // pred_fallthru
      _
    // Predicated region
    $region38: #{mapping_network_forward.1} parent=1 // pred_check
      _
    $region39: #{mapping_network_forward.1} parent=1 // pred_check_branch
      %77 = sbr.rel (0) target = $region41
    $region40: #{mapping_network_forward.1} parent=1 // pred_region
      %78 = dma.done [#allocation6], 4096
    $region41: #{mapping_network_forward.1} parent=1 // pred_fallthru
      _
    // Predicated region
    $region42: #{mapping_network_forward.1} parent=1 // pred_check
      _
    $region43: #{mapping_network_forward.1} parent=1 // pred_check_branch
      %80 = sbr.rel (0) target = $region45
    $region44: #{mapping_network_forward.1} parent=1 // pred_region
      %81 = dma.done [#allocation9], 2048
    $region45: #{mapping_network_forward.1} parent=1 // pred_fallthru
      _
    %v83 = vld [vmem:[#allocation2] sm:$0xff]
    %v84 = vmul.f32 %v83, %v83
    %85 = vadd.xlane.f32.xlu0 %v84
    %v86 = vpop.xlane.xlu0 %85
    %v87 = vrcp.pop 128.0
    %v88 = vmul.f32 %v86, %v87
    %v89 = vadd.f32 %v88, 1e-08
    %v90 = vrsqrt.pop %v89
    %v91 = vmul.f32 %v83, %v90
    %92 = vst [vmem:[#allocation10] sm:$0xff] %v91
    %v93 = vld [vmem:[#allocation5] sm:$0xff]
    %v94 = vld [vmem:[#allocation5 + $0x8] sm:$0xff]
    %v95 = vld [vmem:[#allocation5 + $0x10] sm:$0xff]
    %v96 = vld [vmem:[#allocation5 + $0x18] sm:$0xff]
    %v97 = vld [vmem:[#allocation5 + $0x20] sm:$0xff]
    %v98 = vld [vmem:[#allocation5 + $0x28] sm:$0xff]
    %v99 = vld [vmem:[#allocation5 + $0x30] sm:$0xff]
    %v100 = vld [vmem:[#allocation5 + $0x38] sm:$0xff]
    %v101 = vld [vmem:[#allocation5 + $0x40] sm:$0xff]
    %v102 = vld [vmem:[#allocation5 + $0x48] sm:$0xff]
    %v103 = vld [vmem:[#allocation5 + $0x50] sm:$0xff]
    %v104 = vld [vmem:[#allocation5 + $0x58] sm:$0xff]
    %v105 = vld [vmem:[#allocation5 + $0x60] sm:$0xff]
    %v106 = vld [vmem:[#allocation5 + $0x68] sm:$0xff]
    %v107 = vld [vmem:[#allocation5 + $0x70] sm:$0xff]
    %v108 = vld [vmem:[#allocation5 + $0x78] sm:$0xff]
    %v109 = vld [vmem:[%s2] sm:$0x3]
    %v110 = vpack.c.bf16 %v91, %v91
    %v112 = vlaneseq
    %v113 = vshrl.u32 %v112, 7
    %v114 = vsub.s32 0, %v113
    %v115 = vrot.slane %v109, %v114
    %v116 = vlaneseq
    %v117 = vshrl.u32 %v116, 7
    %v118 = vsub.s32 1, %v117
    %v119 = vrot.slane %v109, %v118
    %v138 = vunpack.c.l.b16 %v93
    %v139 = vunpack.c.h.b16 %v93
    %v140 = vunpack.c.l.b16 %v94
    %v141 = vunpack.c.h.b16 %v94
    %v142 = vunpack.c.l.b16 %v95
    %v143 = vunpack.c.h.b16 %v95
    %v144 = vunpack.c.l.b16 %v96
    %v145 = vunpack.c.h.b16 %v96
    %v146 = vunpack.c.l.b16 %v97
    %v147 = vunpack.c.h.b16 %v97
    %v148 = vunpack.c.l.b16 %v98
    %v149 = vunpack.c.h.b16 %v98
    %v150 = vunpack.c.l.b16 %v99
    %v151 = vunpack.c.h.b16 %v99
    %v152 = vunpack.c.l.b16 %v100
    %v153 = vunpack.c.h.b16 %v100
    %v154 = vunpack.c.l.b16 %v101
    %v155 = vunpack.c.h.b16 %v101
    %v156 = vunpack.c.l.b16 %v102
    %v157 = vunpack.c.h.b16 %v102
    %v158 = vunpack.c.l.b16 %v103
    %v159 = vunpack.c.h.b16 %v103
    %v160 = vunpack.c.l.b16 %v104
    %v161 = vunpack.c.h.b16 %v104
    %v162 = vunpack.c.l.b16 %v105
    %v163 = vunpack.c.h.b16 %v105
    %v164 = vunpack.c.l.b16 %v106
    %v165 = vunpack.c.h.b16 %v106
    %v166 = vunpack.c.l.b16 %v107
    %v167 = vunpack.c.h.b16 %v107
    %v168 = vunpack.c.l.b16 %v108
    %v169 = vunpack.c.h.b16 %v108
    %v170 = vpack.c.b16 %v140, %v138
    %v171 = vpack.c.b16 %v141, %v139
    %v172 = vpack.c.b16 %v144, %v142
    %v173 = vpack.c.b16 %v145, %v143
    %v174 = vpack.c.b16 %v148, %v146
    %v175 = vpack.c.b16 %v149, %v147
    %v176 = vpack.c.b16 %v152, %v150
    %v177 = vpack.c.b16 %v153, %v151
    %v178 = vpack.c.b16 %v156, %v154
    %v179 = vpack.c.b16 %v157, %v155
    %v180 = vpack.c.b16 %v160, %v158
    %v181 = vpack.c.b16 %v161, %v159
    %v182 = vpack.c.b16 %v164, %v162
    %v183 = vpack.c.b16 %v165, %v163
    %v184 = vpack.c.b16 %v168, %v166
    %v185 = vpack.c.b16 %v169, %v167
    %202 = vmatprep.subr.bf16.mxu0 %v171
    %203 = vmatpush1.bf16.msra.mxu0 %v170
    %204 = vmatprep.subr.bf16.mxu0 %v173
    %205 = vmatpush1.bf16.msra.mxu0 %v172
    %206 = vmatprep.subr.bf16.mxu0 %v175
    %207 = vmatpush1.bf16.msra.mxu0 %v174
    %208 = vmatprep.subr.bf16.mxu0 %v177
    %209 = vmatpush1.bf16.msra.mxu0 %v176
    %210 = vmatprep.subr.bf16.mxu0 %v179
    %211 = vmatpush1.bf16.msra.mxu0 %v178
    %212 = vmatprep.subr.bf16.mxu0 %v181
    %213 = vmatpush1.bf16.msra.mxu0 %v180
    %214 = vmatprep.subr.bf16.mxu0 %v183
    %215 = vmatpush1.bf16.msra.mxu0 %v182
    %216 = vmatprep.subr.bf16.mxu0 %v185
    %217 = vmatpush1.bf16.msra.mxu0 %v184
    %218 = vmatprep.subr.bf16.mxu0 0
    %219 = vmatpush1.bf16.msra.mxu0 0
    %220 = vmatprep.subr.bf16.mxu0 0
    %221 = vmatpush1.bf16.msra.mxu0 0
    %222 = vmatprep.subr.bf16.mxu0 0
    %223 = vmatpush1.bf16.msra.mxu0 0
    %224 = vmatprep.subr.bf16.mxu0 0
    %225 = vmatpush1.bf16.msra.mxu0 0
    %226 = vmatprep.subr.bf16.mxu0 0
    %227 = vmatpush1.bf16.msra.mxu0 0
    %228 = vmatprep.subr.bf16.mxu0 0
    %229 = vmatpush1.bf16.msra.mxu0 0
    %230 = vmatprep.subr.bf16.mxu0 0
    %231 = vmatpush1.bf16.msra.mxu0 0
    %232 = vmatprep.subr.bf16.mxu0 0
    %233 = vmatpush1.bf16.msra.mxu0 0
    %234 = vmatprep.mubr.bf16.mxu0 0
    %235 = vmatmul.mubr.bf16.gmra.mrb[0].mxu0 %v110
    %v236 = vpop.f32.mrb[0].mxu0
    %v237 = vadd.f32 %v115, %v236
    %v238 = vpop.f32.mrb[0].mxu0
    %v239 = vadd.f32 %v119, %v238
    %v240 = vpop.f32.mrb[0].mxu0
    %v241 = vpop.f32.mrb[0].mxu0
    %242 = vdwg.mxu0
    %v243 = vmul.f32 %v237, 0.2
    %v244 = vmul.f32 %v239, 0.2
    %v245 = vmax.f32 %v237, %v243
    %v246 = vmax.f32 %v239, %v244
    %v247 = vld [vmem:[#allocation7] sm:$0xff]
    %v248 = vld [vmem:[#allocation7 + $0x8] sm:$0xff]
    %v249 = vld [vmem:[#allocation7 + $0x10] sm:$0xff]
    %v250 = vld [vmem:[#allocation7 + $0x18] sm:$0xff]
    %v251 = vld [vmem:[#allocation7 + $0x20] sm:$0xff]
    %v252 = vld [vmem:[#allocation7 + $0x28] sm:$0xff]
    %v253 = vld [vmem:[#allocation7 + $0x30] sm:$0xff]
    %v254 = vld [vmem:[#allocation7 + $0x38] sm:$0xff]
    %v255 = vld [vmem:[#allocation7 + $0x40] sm:$0xff]
    %v256 = vld [vmem:[#allocation7 + $0x48] sm:$0xff]
    %v257 = vld [vmem:[#allocation7 + $0x50] sm:$0xff]
    %v258 = vld [vmem:[#allocation7 + $0x58] sm:$0xff]
    %v259 = vld [vmem:[#allocation7 + $0x60] sm:$0xff]
    %v260 = vld [vmem:[#allocation7 + $0x68] sm:$0xff]
    %v261 = vld [vmem:[#allocation7 + $0x70] sm:$0xff]
    %v262 = vld [vmem:[#allocation7 + $0x78] sm:$0xff]
    %v263 = vld [vmem:[#allocation7 + $0x80] sm:$0xff]
    %v264 = vld [vmem:[#allocation7 + $0x88] sm:$0xff]
    %v265 = vld [vmem:[#allocation7 + $0x90] sm:$0xff]
    %v266 = vld [vmem:[#allocation7 + $0x98] sm:$0xff]
    %v267 = vld [vmem:[#allocation7 + $0xa0] sm:$0xff]
    %v268 = vld [vmem:[#allocation7 + $0xa8] sm:$0xff]
    %v269 = vld [vmem:[#allocation7 + $0xb0] sm:$0xff]
    %v270 = vld [vmem:[#allocation7 + $0xb8] sm:$0xff]
    %v271 = vld [vmem:[#allocation7 + $0xc0] sm:$0xff]
    %v272 = vld [vmem:[#allocation7 + $0xc8] sm:$0xff]
    %v273 = vld [vmem:[#allocation7 + $0xd0] sm:$0xff]
    %v274 = vld [vmem:[#allocation7 + $0xd8] sm:$0xff]
    %v275 = vld [vmem:[#allocation7 + $0xe0] sm:$0xff]
    %v276 = vld [vmem:[#allocation7 + $0xe8] sm:$0xff]
    %v277 = vld [vmem:[#allocation7 + $0xf0] sm:$0xff]
    %v278 = vld [vmem:[#allocation7 + $0xf8] sm:$0xff]
    %v279 = vld [vmem:[%s4] sm:$0x3]
    %v280 = vpack.c.bf16 %v245, %v245
    %v281 = vpack.c.bf16 %v246, %v246
    %v283 = vlaneseq
    %v284 = vshrl.u32 %v283, 7
    %v285 = vsub.s32 0, %v284
    %v286 = vrot.slane %v279, %v285
    %v287 = vlaneseq
    %v288 = vshrl.u32 %v287, 7
    %v289 = vsub.s32 1, %v288
    %v290 = vrot.slane %v279, %v289
    %v325 = vunpack.c.l.b16 %v247
    %v326 = vunpack.c.h.b16 %v247
    %v327 = vunpack.c.l.b16 %v248
    %v328 = vunpack.c.h.b16 %v248
    %v329 = vunpack.c.l.b16 %v249
    %v330 = vunpack.c.h.b16 %v249
    %v331 = vunpack.c.l.b16 %v250
    %v332 = vunpack.c.h.b16 %v250
    %v333 = vunpack.c.l.b16 %v251
    %v334 = vunpack.c.h.b16 %v251
    %v335 = vunpack.c.l.b16 %v252
    %v336 = vunpack.c.h.b16 %v252
    %v337 = vunpack.c.l.b16 %v253
    %v338 = vunpack.c.h.b16 %v253
    %v339 = vunpack.c.l.b16 %v254
    %v340 = vunpack.c.h.b16 %v254
    %v341 = vunpack.c.l.b16 %v255
    %v342 = vunpack.c.h.b16 %v255
    %v343 = vunpack.c.l.b16 %v256
    %v344 = vunpack.c.h.b16 %v256
    %v345 = vunpack.c.l.b16 %v257
    %v346 = vunpack.c.h.b16 %v257
    %v347 = vunpack.c.l.b16 %v258
    %v348 = vunpack.c.h.b16 %v258
    %v349 = vunpack.c.l.b16 %v259
    %v350 = vunpack.c.h.b16 %v259
    %v351 = vunpack.c.l.b16 %v260
    %v352 = vunpack.c.h.b16 %v260
    %v353 = vunpack.c.l.b16 %v261
    %v354 = vunpack.c.h.b16 %v261
    %v355 = vunpack.c.l.b16 %v262
    %v356 = vunpack.c.h.b16 %v262
    %v357 = vunpack.c.l.b16 %v263
    %v358 = vunpack.c.h.b16 %v263
    %v359 = vunpack.c.l.b16 %v264
    %v360 = vunpack.c.h.b16 %v264
    %v361 = vunpack.c.l.b16 %v265
    %v362 = vunpack.c.h.b16 %v265
    %v363 = vunpack.c.l.b16 %v266
    %v364 = vunpack.c.h.b16 %v266
    %v365 = vunpack.c.l.b16 %v267
    %v366 = vunpack.c.h.b16 %v267
    %v367 = vunpack.c.l.b16 %v268
    %v368 = vunpack.c.h.b16 %v268
    %v369 = vunpack.c.l.b16 %v269
    %v370 = vunpack.c.h.b16 %v269
    %v371 = vunpack.c.l.b16 %v270
    %v372 = vunpack.c.h.b16 %v270
    %v373 = vunpack.c.l.b16 %v271
    %v374 = vunpack.c.h.b16 %v271
    %v375 = vunpack.c.l.b16 %v272
    %v376 = vunpack.c.h.b16 %v272
    %v377 = vunpack.c.l.b16 %v273
    %v378 = vunpack.c.h.b16 %v273
    %v379 = vunpack.c.l.b16 %v274
    %v380 = vunpack.c.h.b16 %v274
    %v381 = vunpack.c.l.b16 %v275
    %v382 = vunpack.c.h.b16 %v275
    %v383 = vunpack.c.l.b16 %v276
    %v384 = vunpack.c.h.b16 %v276
    %v385 = vunpack.c.l.b16 %v277
    %v386 = vunpack.c.h.b16 %v277
    %v387 = vunpack.c.l.b16 %v278
    %v388 = vunpack.c.h.b16 %v278
    %v389 = vpack.c.b16 %v327, %v325
    %v390 = vpack.c.b16 %v328, %v326
    %v391 = vpack.c.b16 %v331, %v329
    %v392 = vpack.c.b16 %v332, %v330
    %v393 = vpack.c.b16 %v335, %v333
    %v394 = vpack.c.b16 %v336, %v334
    %v395 = vpack.c.b16 %v339, %v337
    %v396 = vpack.c.b16 %v340, %v338
    %v397 = vpack.c.b16 %v343, %v341
    %v398 = vpack.c.b16 %v344, %v342
    %v399 = vpack.c.b16 %v347, %v345
    %v400 = vpack.c.b16 %v348, %v346
    %v401 = vpack.c.b16 %v351, %v349
    %v402 = vpack.c.b16 %v352, %v350
    %v403 = vpack.c.b16 %v355, %v353
    %v404 = vpack.c.b16 %v356, %v354
    %v405 = vpack.c.b16 %v359, %v357
    %v406 = vpack.c.b16 %v360, %v358
    %v407 = vpack.c.b16 %v363, %v361
    %v408 = vpack.c.b16 %v364, %v362
    %v409 = vpack.c.b16 %v367, %v365
    %v410 = vpack.c.b16 %v368, %v366
    %v411 = vpack.c.b16 %v371, %v369
    %v412 = vpack.c.b16 %v372, %v370
    %v413 = vpack.c.b16 %v375, %v373
    %v414 = vpack.c.b16 %v376, %v374
    %v415 = vpack.c.b16 %v379, %v377
    %v416 = vpack.c.b16 %v380, %v378
    %v417 = vpack.c.b16 %v383, %v381
    %v418 = vpack.c.b16 %v384, %v382
    %v419 = vpack.c.b16 %v387, %v385
    %v420 = vpack.c.b16 %v388, %v386
    %453 = vmatprep.subr.bf16.mxu0 %v390
    %454 = vmatpush1.bf16.msra.mxu0 %v389
    %455 = vmatprep.subr.bf16.mxu0 %v392
    %456 = vmatpush1.bf16.msra.mxu0 %v391
    %457 = vmatprep.subr.bf16.mxu0 %v394
    %458 = vmatpush1.bf16.msra.mxu0 %v393
    %459 = vmatprep.subr.bf16.mxu0 %v396
    %460 = vmatpush1.bf16.msra.mxu0 %v395
    %461 = vmatprep.subr.bf16.mxu0 %v398
    %462 = vmatpush1.bf16.msra.mxu0 %v397
    %463 = vmatprep.subr.bf16.mxu0 %v400
    %464 = vmatpush1.bf16.msra.mxu0 %v399
    %465 = vmatprep.subr.bf16.mxu0 %v402
    %466 = vmatpush1.bf16.msra.mxu0 %v401
    %467 = vmatprep.subr.bf16.mxu0 %v404
    %468 = vmatpush1.bf16.msra.mxu0 %v403
    %469 = vmatprep.subr.bf16.mxu0 %v406
    %470 = vmatpush1.bf16.msra.mxu0 %v405
    %471 = vmatprep.subr.bf16.mxu0 %v408
    %472 = vmatpush1.bf16.msra.mxu0 %v407
    %473 = vmatprep.subr.bf16.mxu0 %v410
    %474 = vmatpush1.bf16.msra.mxu0 %v409
    %475 = vmatprep.subr.bf16.mxu0 %v412
    %476 = vmatpush1.bf16.msra.mxu0 %v411
    %477 = vmatprep.subr.bf16.mxu0 %v414
    %478 = vmatpush1.bf16.msra.mxu0 %v413
    %479 = vmatprep.subr.bf16.mxu0 %v416
    %480 = vmatpush1.bf16.msra.mxu0 %v415
    %481 = vmatprep.subr.bf16.mxu0 %v418
    %482 = vmatpush1.bf16.msra.mxu0 %v417
    %483 = vmatprep.subr.bf16.mxu0 %v420
    %484 = vmatpush1.bf16.msra.mxu0 %v419
    %485 = vmatprep.mubr.bf16.mxu0 %v281
    %486 = vmatmul.mubr.bf16.gmra.mrb[0].mxu0 %v280
    %v487 = vpop.f32.mrb[0].mxu0
    %v488 = vadd.f32 %v286, %v487
    %v489 = vpop.f32.mrb[0].mxu0
    %v490 = vadd.f32 %v290, %v489
    %v491 = vpop.f32.mrb[0].mxu0
    %v492 = vpop.f32.mrb[0].mxu0
    %493 = vdwg.mxu0
    %v494 = vmul.f32 %v488, 0.2
    %v495 = vmul.f32 %v490, 0.2
    %v496 = vmax.f32 %v488, %v494
    %v497 = vmax.f32 %v490, %v495
    %v498 = vld [vmem:[#allocation8] sm:$0xf]
    %v499 = vld [vmem:[#allocation8 + $0x4] sm:$0xf]
    %v500 = vld [vmem:[#allocation8 + $0x8] sm:$0xf]
    %v501 = vld [vmem:[#allocation8 + $0xc] sm:$0xf]
    %v502 = vld [vmem:[#allocation8 + $0x10] sm:$0xf]
    %v503 = vld [vmem:[#allocation8 + $0x14] sm:$0xf]
    %v504 = vld [vmem:[#allocation8 + $0x18] sm:$0xf]
    %v505 = vld [vmem:[#allocation8 + $0x1c] sm:$0xf]
    %v506 = vld [vmem:[#allocation8 + $0x20] sm:$0xf]
    %v507 = vld [vmem:[#allocation8 + $0x24] sm:$0xf]
    %v508 = vld [vmem:[#allocation8 + $0x28] sm:$0xf]
    %v509 = vld [vmem:[#allocation8 + $0x2c] sm:$0xf]
    %v510 = vld [vmem:[#allocation8 + $0x30] sm:$0xf]
    %v511 = vld [vmem:[#allocation8 + $0x34] sm:$0xf]
    %v512 = vld [vmem:[#allocation8 + $0x38] sm:$0xf]
    %v513 = vld [vmem:[#allocation8 + $0x3c] sm:$0xf]
    %v514 = vld [vmem:[#allocation8 + $0x40] sm:$0xf]
    %v515 = vld [vmem:[#allocation8 + $0x44] sm:$0xf]
    %v516 = vld [vmem:[#allocation8 + $0x48] sm:$0xf]
    %v517 = vld [vmem:[#allocation8 + $0x4c] sm:$0xf]
    %v518 = vld [vmem:[#allocation8 + $0x50] sm:$0xf]
    %v519 = vld [vmem:[#allocation8 + $0x54] sm:$0xf]
    %v520 = vld [vmem:[#allocation8 + $0x58] sm:$0xf]
    %v521 = vld [vmem:[#allocation8 + $0x5c] sm:$0xf]
    %v522 = vld [vmem:[#allocation8 + $0x60] sm:$0xf]
    %v523 = vld [vmem:[#allocation8 + $0x64] sm:$0xf]
    %v524 = vld [vmem:[#allocation8 + $0x68] sm:$0xf]
    %v525 = vld [vmem:[#allocation8 + $0x6c] sm:$0xf]
    %v526 = vld [vmem:[#allocation8 + $0x70] sm:$0xf]
    %v527 = vld [vmem:[#allocation8 + $0x74] sm:$0xf]
    %v528 = vld [vmem:[#allocation8 + $0x78] sm:$0xf]
    %v529 = vld [vmem:[#allocation8 + $0x7c] sm:$0xf]
    %v530 = vld [vmem:[%s6] sm:$0x1]
    %v531 = vpack.c.bf16 %v496, %v496
    %v532 = vpack.c.bf16 %v497, %v497
    %v534 = vlaneseq
    %v535 = vshrl.u32 %v534, 7
    %v536 = vsub.s32 0, %v535
    %v537 = vrot.slane %v530, %v536
    %v571 = vunpack.c.l.b16 %v498
    %v572 = vunpack.c.l.b16 %v499
    %v573 = vunpack.c.l.b16 %v500
    %v574 = vunpack.c.l.b16 %v501
    %v575 = vunpack.c.l.b16 %v502
    %v576 = vunpack.c.l.b16 %v503
    %v577 = vunpack.c.l.b16 %v504
    %v578 = vunpack.c.l.b16 %v505
    %v579 = vunpack.c.l.b16 %v506
    %v580 = vunpack.c.l.b16 %v507
    %v581 = vunpack.c.l.b16 %v508
    %v582 = vunpack.c.l.b16 %v509
    %v583 = vunpack.c.l.b16 %v510
    %v584 = vunpack.c.l.b16 %v511
    %v585 = vunpack.c.l.b16 %v512
    %v586 = vunpack.c.l.b16 %v513
    %v587 = vunpack.c.l.b16 %v514
    %v588 = vunpack.c.l.b16 %v515
    %v589 = vunpack.c.l.b16 %v516
    %v590 = vunpack.c.l.b16 %v517
    %v591 = vunpack.c.l.b16 %v518
    %v592 = vunpack.c.l.b16 %v519
    %v593 = vunpack.c.l.b16 %v520
    %v594 = vunpack.c.l.b16 %v521
    %v595 = vunpack.c.l.b16 %v522
    %v596 = vunpack.c.l.b16 %v523
    %v597 = vunpack.c.l.b16 %v524
    %v598 = vunpack.c.l.b16 %v525
    %v599 = vunpack.c.l.b16 %v526
    %v600 = vunpack.c.l.b16 %v527
    %v601 = vunpack.c.l.b16 %v528
    %v602 = vunpack.c.l.b16 %v529
    %v603 = vpack.c.b16 %v572, %v571
    %v604 = vpack.c.b16 %v574, %v573
    %v605 = vpack.c.b16 %v576, %v575
    %v606 = vpack.c.b16 %v578, %v577
    %v607 = vpack.c.b16 %v580, %v579
    %v608 = vpack.c.b16 %v582, %v581
    %v609 = vpack.c.b16 %v584, %v583
    %v610 = vpack.c.b16 %v586, %v585
    %v611 = vpack.c.b16 %v588, %v587
    %v612 = vpack.c.b16 %v590, %v589
    %v613 = vpack.c.b16 %v592, %v591
    %v614 = vpack.c.b16 %v594, %v593
    %v615 = vpack.c.b16 %v596, %v595
    %v616 = vpack.c.b16 %v598, %v597
    %v617 = vpack.c.b16 %v600, %v599
    %v618 = vpack.c.b16 %v602, %v601
    %635 = vmatprep.subr.bf16.mxu0 0
    %636 = vmatpush1.bf16.msra.mxu0 %v603
    %637 = vmatprep.subr.bf16.mxu0 0
    %638 = vmatpush1.bf16.msra.mxu0 %v604
    %639 = vmatprep.subr.bf16.mxu0 0
    %640 = vmatpush1.bf16.msra.mxu0 %v605
    %641 = vmatprep.subr.bf16.mxu0 0
    %642 = vmatpush1.bf16.msra.mxu0 %v606
    %643 = vmatprep.subr.bf16.mxu0 0
    %644 = vmatpush1.bf16.msra.mxu0 %v607
    %645 = vmatprep.subr.bf16.mxu0 0
    %646 = vmatpush1.bf16.msra.mxu0 %v608
    %647 = vmatprep.subr.bf16.mxu0 0
    %648 = vmatpush1.bf16.msra.mxu0 %v609
    %649 = vmatprep.subr.bf16.mxu0 0
    %650 = vmatpush1.bf16.msra.mxu0 %v610
    %651 = vmatprep.subr.bf16.mxu0 0
    %652 = vmatpush1.bf16.msra.mxu0 %v611
    %653 = vmatprep.subr.bf16.mxu0 0
    %654 = vmatpush1.bf16.msra.mxu0 %v612
    %655 = vmatprep.subr.bf16.mxu0 0
    %656 = vmatpush1.bf16.msra.mxu0 %v613
    %657 = vmatprep.subr.bf16.mxu0 0
    %658 = vmatpush1.bf16.msra.mxu0 %v614
    %659 = vmatprep.subr.bf16.mxu0 0
    %660 = vmatpush1.bf16.msra.mxu0 %v615
    %661 = vmatprep.subr.bf16.mxu0 0
    %662 = vmatpush1.bf16.msra.mxu0 %v616
    %663 = vmatprep.subr.bf16.mxu0 0
    %664 = vmatpush1.bf16.msra.mxu0 %v617
    %665 = vmatprep.subr.bf16.mxu0 0
    %666 = vmatpush1.bf16.msra.mxu0 %v618
    %667 = vmatprep.mubr.bf16.mxu0 %v532
    %668 = vmatmul.mubr.bf16.gmra.mrb[0].mxu0 %v531
    %v669 = vpop.f32.mrb[0].mxu0
    %v670 = vadd.f32 %v537, %v669
    %v671 = vpop.f32.mrb[0].mxu0
    %v672 = vpop.f32.mrb[0].mxu0
    %v673 = vpop.f32.mrb[0].mxu0
    %674 = vdwg.mxu0
    %v675 = vmul.f32 %v670, 0.2
    %v676 = vmax.f32 %v670, %v675
    %677 = vst [vmem:[%s7] sm:$0xff] %v676
    // Predicated region
    $region46: #{mapping_network_forward.1} parent=1 // pred_check
      _
    $region47: #{mapping_network_forward.1} parent=1 // pred_check_branch
      %679 = sbr.rel (0) target = $region49
    $region48: #{mapping_network_forward.1} parent=1 // pred_region
      _
    $region49: #{mapping_network_forward.1} parent=1 // pred_fallthru
      _
    // Predicated region
    $region50: #{mapping_network_forward.1} parent=1 // pred_check
      _
    $region51: #{mapping_network_forward.1} parent=1 // pred_check_branch
      %681 = sbr.rel (0) target = $region53
    $region52: #{mapping_network_forward.1} parent=1 // pred_region
      %s683 = ssub.s32 128, 128
      %684 = vsyncadd [#allocation4], %s683
      %s686 = sshll.u32 [#allocation10], 4
      %s687 = int_to_ptr.vmem [resolvable:$true] %s686
      %689 = dma.vmem_to_hbm [thread:$0]  %s687, 128, %s8, [#allocation4]
    $region53: #{mapping_network_forward.1} parent=1 // pred_fallthru
      _
    // Predicated region
    $region54: #{mapping_network_forward.1} parent=1 // pred_check
      _
    $region55: #{mapping_network_forward.1} parent=1 // pred_check_branch
      %691 = sbr.rel (0) target = $region57
    $region56: #{mapping_network_forward.1} parent=1 // pred_region
      _
    $region57: #{mapping_network_forward.1} parent=1 // pred_fallthru
      _
    // Predicated region
    $region58: #{mapping_network_forward.1} parent=1 // pred_check
      _
    $region59: #{mapping_network_forward.1} parent=1 // pred_check_branch
      %693 = sbr.rel (0) target = $region61
    $region60: #{mapping_network_forward.1} parent=1 // pred_region
      %694 = dma.done [#allocation4], 128
    $region61: #{mapping_network_forward.1} parent=1 // pred_fallthru
      _
    %695 = vsyncpa [#allocation3], 1
    %696 = vsyncpa [#allocation6], 1
    %697 = vsyncpa [#allocation9], 1
    %698 = vsyncpa [#allocation4], 1

</llo_original>
